<compile_context>
chip_gen: v7x
topology: tpu7x:2x2x1
jax: 0.10.0
libtpu: 0.0.40
codegen_flags: <defaults>
</compile_context>

<pallas_src>
import numpy as np
import jax
import jax.numpy as jnp
from jax import lax
from jax.experimental import pallas as pl
from jax.experimental.pallas import tpu as pltpu

_NEG_SLOPE = 0.01        # torch.nn.functional.leaky_relu default negative_slope
_LANE = 128
_SUBLANE = 8
_GRID_MIN_BATCH = 256    # below this, a single un-gridded block is cheaper


def _round_up(n, m):
    return ((n + m - 1) // m) * m


# ----------------------------- Pallas kernels -------------------------------

def _fc_lrelu_single_kernel(x_ref, w_ref, b_ref, o_ref):
    # Whole problem in VMEM: (B, Kp) @ (Kp, Np) on the MXU with f32 accumulation,
    # then bias + leaky_relu on the VPU, one launch, no HBM round-trips.
    acc = jnp.dot(x_ref[...], w_ref[...], preferred_element_type=jnp.float32)
    acc = acc + b_ref[...]
    o_ref[...] = jnp.where(acc >= 0.0, acc, _NEG_SLOPE * acc).astype(o_ref.dtype)


def _fc_lrelu_grid_kernel(x_ref, w_ref, b_ref, o_ref, acc_ref):
    # Grid = (M tiles, K tiles).  Output tile is resident across the K axis;
    # accumulate in an f32 VMEM scratch, apply bias + leaky_relu at the last K step.
    k = pl.program_id(1)

    @pl.when(k == 0)
    def _():
        acc_ref[...] = jnp.zeros_like(acc_ref)

    acc_ref[...] += jnp.dot(x_ref[...], w_ref[...],
                            preferred_element_type=jnp.float32)

    @pl.when(k == pl.num_programs(1) - 1)
    def _():
        y = acc_ref[...] + b_ref[...]
        o_ref[...] = jnp.where(y >= 0.0, y, _NEG_SLOPE * y).astype(o_ref.dtype)


# ------------------------- parameters (padded once) -------------------------

def init_params(key, input_dim, hidden_dim):
    # Mirrors nn.Linear default init: U(-1/sqrt(fan_in), 1/sqrt(fan_in)).
    flat_dim = int(np.prod(input_dim))
    k1, k2 = jax.random.split(key)
    bound = 1.0 / np.sqrt(flat_dim)
    w = jax.random.uniform(k1, (flat_dim, hidden_dim), jnp.float32, -bound, bound)
    b = jax.random.uniform(k2, (hidden_dim,), jnp.float32, -bound, bound)
    return {'w': w, 'b': b}


def prepare_padded_params(w, b, compute_dtype=jnp.float32):
    """Pad fc1 weights/bias to lane-dense shapes ONCE (hoisted out of forward)."""
    K, N = w.shape
    Kp = _round_up(K, _LANE)
    Np = _round_up(N, _LANE)
    w_p = jnp.zeros((Kp, Np), compute_dtype).at[:K, :N].set(w.astype(compute_dtype))
    b_p = jnp.zeros((1, Np), jnp.float32).at[0, :N].set(b.astype(jnp.float32))
    return w_p, b_p


# --------------------------------- forward ----------------------------------

def mlp_base_forward(x, w_p, b_p, out_features,
                     compute_dtype=jnp.float32, block_m=256, block_k_max=1024):
    """Mlp_Base.forward: x.reshape(B, -1) -> Linear(flat, hidden) -> leaky_relu.

    x: (B, *input_dim); w_p: (Kp, Np) pre-padded fc1.weight.T; b_p: (1, Np) pre-padded bias.
    """
    Kp, Np = w_p.shape
    B = x.shape[0]
    x2 = x.reshape(B, -1).astype(compute_dtype)
    K = x2.shape[1]
    assert K <= Kp and out_features <= Np

    if K != Kp:
        # Only the lane (K) axis ever needs padding; M padding is unnecessary
        # (full-dim block / masked sublane stores handle B < 8).
        x2 = jnp.pad(x2, ((0, 0), (0, Kp - K)))

    cost = pl.CostEstimate(
        flops=2 * B * Kp * Np,
        transcendentals=0,
        bytes_accessed=(x2.size * x2.dtype.itemsize
                        + w_p.size * w_p.dtype.itemsize
                        + Np * 4 + B * Np * 4),
    )

    if B < _GRID_MIN_BATCH:
        # Tiny-batch path: one block, no grid, everything VMEM resident.
        vmem = pl.BlockSpec(memory_space=pltpu.MemorySpace.VMEM)
        out_p = pl.pallas_call(
            _fc_lrelu_single_kernel,
            out_shape=jax.ShapeDtypeStruct((B, Np), jnp.float32),
            in_specs=[vmem, vmem, vmem],
            out_specs=vmem,
            cost_estimate=cost,
        )(x2, w_p, b_p)
        return out_p[:, :out_features]

    # Gridded path: tile M (parallel) and accumulate over K (arbitrary).
    tm = block_m
    tk = Kp
    for cand in (1024, 512, 256, 128):
        if cand <= block_k_max and Kp % cand == 0:
            tk = cand
            break
    grid = (pl.cdiv(B, tm), Kp // tk)

    out_p = pl.pallas_call(
        _fc_lrelu_grid_kernel,
        out_shape=jax.ShapeDtypeStruct((B, Np), jnp.float32),
        grid_spec=pltpu.PrefetchScalarGridSpec(
            num_scalar_prefetch=0,
            grid=grid,
            in_specs=[
                pl.BlockSpec((tm, tk), lambda i, k: (i, k)),
                pl.BlockSpec((tk, Np), lambda i, k: (k, 0)),
                pl.BlockSpec((1, Np), lambda i, k: (0, 0)),
            ],
            out_specs=pl.BlockSpec((tm, Np), lambda i, k: (i, 0)),
            scratch_shapes=[pltpu.VMEM((tm, Np), jnp.float32)],
        ),
        compiler_params=pltpu.CompilerParams(
            dimension_semantics=("parallel", "arbitrary")),
        cost_estimate=cost,
    )(x2, w_p, b_p)
    return out_p[:, :out_features]


# ------------------------ pure-JAX reference (check) ------------------------

def reference_forward(x, w, b, compute_dtype=jnp.float32):
    B = x.shape[0]
    x32 = x.reshape(B, -1).astype(compute_dtype).astype(jnp.float32)
    w32 = w.astype(compute_dtype).astype(jnp.float32)
    y = jnp.dot(x32, w32, precision=lax.Precision.HIGHEST) + b.astype(jnp.float32)
    return jnp.where(y >= 0.0, y, _NEG_SLOPE * y)


if __name__ == "__main__":
    key = jax.random.PRNGKey(0)
    kx1, kx2, kp = jax.random.split(key, 3)

    # input_dim = (4, 16, 16) -> flat_dim = 1024; hidden = 32
    C, H, W = 4, 16, 16
    hidden_dim = 32
    params = init_params(kp, (C, H, W), hidden_dim)

    fwd = jax.jit(mlp_base_forward,
                  static_argnames=('out_features', 'compute_dtype',
                                   'block_m', 'block_k_max'))

    # --- 1) tiny batch (module's typical use): single-block f32 path ---------
    B1 = 2
    x1 = jax.random.normal(kx1, (B1, C, H, W), jnp.float32)
    w_p32, b_p32 = prepare_padded_params(params['w'], params['b'], jnp.float32)
    out1 = jax.block_until_ready(fwd(x1, w_p32, b_p32, out_features=hidden_dim))
    assert out1.shape == (B1, hidden_dim)
    ref1 = reference_forward(x1, params['w'], params['b'])
    np.testing.assert_allclose(np.asarray(out1), np.asarray(ref1),
                               rtol=1e-5, atol=1e-5)

    # --- 2) larger batch: M-parallel / K-accumulating grid, bf16 MXU operands
    B2 = 512
    x2 = jax.random.normal(kx2, (B2, C, H, W), jnp.float32)
    w_pbf, b_pbf = prepare_padded_params(params['w'], params['b'], jnp.bfloat16)
    out2 = jax.block_until_ready(
        fwd(x2, w_pbf, b_pbf, out_features=hidden_dim,
            compute_dtype=jnp.bfloat16, block_m=256, block_k_max=512))
    assert out2.shape == (B2, hidden_dim)
    ref2 = reference_forward(x2, params['w'], params['b'],
                             compute_dtype=jnp.bfloat16)
    np.testing.assert_allclose(np.asarray(out2), np.asarray(ref2),
                               rtol=1e-2, atol=1e-2)

    print("KERNEL_OK")
</pallas_src>

<mosaic_0001>
module attributes {stable_mosaic.version = 11 : i64} {
  func.func @_fc_lrelu_single_kernel(%arg0: memref<2x1024xf32, #tpu.memory_space<vmem>>, %arg1: memref<1024x128xf32, #tpu.memory_space<vmem>>, %arg2: memref<1x128xf32, #tpu.memory_space<vmem>>, %arg3: memref<2x128xf32, #tpu.memory_space<vmem>>) attributes {dimension_semantics = [], scalar_prefetch = 0 : i64, scratch_operands = 0 : i64, tpu.core_type = #tpu.core_type<tc>} {
    %c0 = arith.constant 0 : index
    %c0_0 = arith.constant 0 : index
    %0 = vector.load %arg0[%c0, %c0_0] : memref<2x1024xf32, #tpu.memory_space<vmem>>, vector<2x1024xf32>
    %c0_1 = arith.constant 0 : index
    %c0_2 = arith.constant 0 : index
    %1 = vector.load %arg1[%c0_1, %c0_2] : memref<1024x128xf32, #tpu.memory_space<vmem>>, vector<1024x128xf32>
    %cst = arith.constant dense<0.000000e+00> : vector<2x128xf32>
    %2 = tpu.matmul %0, %1, %cst {dimension_numbers = #tpu.dot_dimension_numbers<[1], [0], [0], [1], [0, 0, 1, 1], [], []>} : vector<2x1024xf32>, vector<1024x128xf32>, vector<2x128xf32> -> vector<2x128xf32>
    %c0_3 = arith.constant 0 : index
    %c0_4 = arith.constant 0 : index
    %3 = vector.load %arg2[%c0_3, %c0_4] : memref<1x128xf32, #tpu.memory_space<vmem>>, vector<1x128xf32>
    %4 = vector.broadcast %3 : vector<1x128xf32> to vector<2x128xf32>
    %5 = arith.addf %2, %4 : vector<2x128xf32>
    %cst_5 = arith.constant 0.000000e+00 : f32
    %6 = vector.broadcast %cst_5 : f32 to vector<2x128xf32>
    %7 = arith.cmpf oge, %5, %6 : vector<2x128xf32>
    %cst_6 = arith.constant 0.00999999977 : f32
    %8 = vector.broadcast %cst_6 : f32 to vector<2x128xf32>
    %9 = arith.mulf %8, %5 : vector<2x128xf32>
    %10 = arith.select %7, %5, %9 : vector<2x128xi1>, vector<2x128xf32>
    %c0_7 = arith.constant 0 : index
    %c0_8 = arith.constant 0 : index
    %11 = vector.load %arg3[%c0_7, %c0_8] : memref<2x128xf32, #tpu.memory_space<vmem>>, vector<2x128xf32>
    tpu.vector_store %arg3[%c0_7, %c0_8], %10 {strides = array<i32>} : memref<2x128xf32, #tpu.memory_space<vmem>>, vector<2x128xf32>,
    return
  }
}

</mosaic_0001>

<llo_original>
// kernel: mlp_base_forward.1
$region0: #{mlp_base_forward.1}
  #allocation0 [shape = 'u32[]', space=smem, size = 0x4, offset = 0x4, fixed_abs, tag = 'smem constant byte address 0x4 - core index']
  #allocation1 [shape = 'u32[144,128]{1,0:T(1,128)}', space=vmem, size = 0x12000, scoped, tag = 'internal scratch']
  %s0 = inlined_call_operand.vmem [shape: f32[2,1024], index: 0, kind: input, shape index: {}]
  %s1 = inlined_call_operand.hbm [shape: f32[1024,128], index: 1, kind: input, shape index: {}]
  %s2 = inlined_call_operand.vmem [shape: f32[1,128], index: 2, kind: input, shape index: {}]
  %s3 = inlined_call_operand.hbm [shape: f32[2,128], index: 3, kind: output, shape index: {}]
  %s4 = sld [smem:[#allocation0]]
  $region26: #{mlp_base_forward.1} parent=0
    _
  %s6 = ssub.s32 1, %s4
  %s7 = scalar_select 0, %s6, %s4
  $region1: #{mlp_base_forward.1} parent=0
    #allocation2 [shape = 'u8[524288]{0}', space=vmem, size = 0x80000, scoped, tag = 'input window, operand 1, single buffered']
    #allocation3 [shape = 's32[1]{0}', space=sflag, size = 0x4, scoped, tag = 'scoped memory for mlp_base_forward.1']
    #allocation4 [shape = 's32[1]{0}', space=sflag, size = 0x4, scoped, tag = 'scoped memory for mlp_base_forward.1']
    #allocation5 [shape = 'u8[1024]{0}', space=vmem, size = 0x400, scoped, tag = 'output window, operand 0, single buffered']
    %8 = vsyncpa [#allocation3], 0
    %9 = vsyncpa [#allocation4], 0
    // Predicated region
    $region2: #{mlp_base_forward.1} parent=1 // pred_check
      _
    $region3: #{mlp_base_forward.1} parent=1 // pred_check_branch
      %11 = sbr.rel (0) target = $region5
    $region4: #{mlp_base_forward.1} parent=1 // pred_region
      _
    $region5: #{mlp_base_forward.1} parent=1 // pred_fallthru
      _
    // Predicated region
    $region6: #{mlp_base_forward.1} parent=1 // pred_check
      _
    $region7: #{mlp_base_forward.1} parent=1 // pred_check_branch
      %13 = sbr.rel (0) target = $region9
    $region8: #{mlp_base_forward.1} parent=1 // pred_region
      %s15 = ssub.s32 16384, 16384
      %16 = vsyncadd [#allocation3], %s15
      %s17 = sshll.u32 [#allocation2], 4
      %s18 = int_to_ptr.vmem [resolvable:$true] %s17
      %23 = dma.hbm_to_vmem [thread:$0]  %s1, 16384, %s18, [#allocation3], 128, 128, 8
    $region9: #{mlp_base_forward.1} parent=1 // pred_fallthru
      _
    // Predicated region
    $region10: #{mlp_base_forward.1} parent=1 // pred_check
      _
    $region11: #{mlp_base_forward.1} parent=1 // pred_check_branch
      %25 = sbr.rel (0) target = $region13
    $region12: #{mlp_base_forward.1} parent=1 // pred_region
      _
    $region13: #{mlp_base_forward.1} parent=1 // pred_fallthru
      _
    // Predicated region
    $region14: #{mlp_base_forward.1} parent=1 // pred_check
      _
    $region15: #{mlp_base_forward.1} parent=1 // pred_check_branch
      %27 = sbr.rel (0) target = $region17
    $region16: #{mlp_base_forward.1} parent=1 // pred_region
      %28 = dma.done [#allocation3], 16384
    $region17: #{mlp_base_forward.1} parent=1 // pred_fallthru
      _
    %v29 = vld [vmem:[%s0] sm:$0xff]
    %v30 = vld [vmem:[%s0 + $0x8] sm:$0xff]
    %v31 = vld [vmem:[#allocation2] sm:$0xff]
    %v32 = vld [vmem:[#allocation2 + $0x8] sm:$0xff]
    %v33 = vld [vmem:[#allocation2 + $0x10] sm:$0xff]
    %v34 = vld [vmem:[#allocation2 + $0x18] sm:$0xff]
    %v35 = vld [vmem:[#allocation2 + $0x20] sm:$0xff]
    %v36 = vld [vmem:[#allocation2 + $0x28] sm:$0xff]
    %v37 = vld [vmem:[#allocation2 + $0x30] sm:$0xff]
    %v38 = vld [vmem:[#allocation2 + $0x38] sm:$0xff]
    %v39 = vld [vmem:[#allocation2 + $0x40] sm:$0xff]
    %v40 = vld [vmem:[#allocation2 + $0x48] sm:$0xff]
    %v41 = vld [vmem:[#allocation2 + $0x50] sm:$0xff]
    %v42 = vld [vmem:[#allocation2 + $0x58] sm:$0xff]
    %v43 = vld [vmem:[#allocation2 + $0x60] sm:$0xff]
    %v44 = vld [vmem:[#allocation2 + $0x68] sm:$0xff]
    %v45 = vld [vmem:[#allocation2 + $0x70] sm:$0xff]
    %v46 = vld [vmem:[#allocation2 + $0x78] sm:$0xff]
    %v47 = vld [vmem:[#allocation2 + $0x80] sm:$0xff]
    %v48 = vld [vmem:[#allocation2 + $0x88] sm:$0xff]
    %v49 = vld [vmem:[#allocation2 + $0x90] sm:$0xff]
    %v50 = vld [vmem:[#allocation2 + $0x98] sm:$0xff]
    %v51 = vld [vmem:[#allocation2 + $0xa0] sm:$0xff]
    %v52 = vld [vmem:[#allocation2 + $0xa8] sm:$0xff]
    %v53 = vld [vmem:[#allocation2 + $0xb0] sm:$0xff]
    %v54 = vld [vmem:[#allocation2 + $0xb8] sm:$0xff]
    %v55 = vld [vmem:[#allocation2 + $0xc0] sm:$0xff]
    %v56 = vld [vmem:[#allocation2 + $0xc8] sm:$0xff]
    %v57 = vld [vmem:[#allocation2 + $0xd0] sm:$0xff]
    %v58 = vld [vmem:[#allocation2 + $0xd8] sm:$0xff]
    %v59 = vld [vmem:[#allocation2 + $0xe0] sm:$0xff]
    %v60 = vld [vmem:[#allocation2 + $0xe8] sm:$0xff]
    %v61 = vld [vmem:[#allocation2 + $0xf0] sm:$0xff]
    %v62 = vld [vmem:[#allocation2 + $0xf8] sm:$0xff]
    %v63 = vld [vmem:[#allocation2 + $0x100] sm:$0xff]
    %v64 = vld [vmem:[#allocation2 + $0x108] sm:$0xff]
    %v65 = vld [vmem:[#allocation2 + $0x110] sm:$0xff]
    %v66 = vld [vmem:[#allocation2 + $0x118] sm:$0xff]
    %v67 = vld [vmem:[#allocation2 + $0x120] sm:$0xff]
    %v68 = vld [vmem:[#allocation2 + $0x128] sm:$0xff]
    %v69 = vld [vmem:[#allocation2 + $0x130] sm:$0xff]
    %v70 = vld [vmem:[#allocation2 + $0x138] sm:$0xff]
    %v71 = vld [vmem:[#allocation2 + $0x140] sm:$0xff]
    %v72 = vld [vmem:[#allocation2 + $0x148] sm:$0xff]
    %v73 = vld [vmem:[#allocation2 + $0x150] sm:$0xff]
    %v74 = vld [vmem:[#allocation2 + $0x158] sm:$0xff]
    %v75 = vld [vmem:[#allocation2 + $0x160] sm:$0xff]
    %v76 = vld [vmem:[#allocation2 + $0x168] sm:$0xff]
    %v77 = vld [vmem:[#allocation2 + $0x170] sm:$0xff]
    %v78 = vld [vmem:[#allocation2 + $0x178] sm:$0xff]
    %v79 = vld [vmem:[#allocation2 + $0x180] sm:$0xff]
    %v80 = vld [vmem:[#allocation2 + $0x188] sm:$0xff]
    %v81 = vld [vmem:[#allocation2 + $0x190] sm:$0xff]
    %v82 = vld [vmem:[#allocation2 + $0x198] sm:$0xff]
    %v83 = vld [vmem:[#allocation2 + $0x1a0] sm:$0xff]
    %v84 = vld [vmem:[#allocation2 + $0x1a8] sm:$0xff]
    %v85 = vld [vmem:[#allocation2 + $0x1b0] sm:$0xff]
    %v86 = vld [vmem:[#allocation2 + $0x1b8] sm:$0xff]
    %v87 = vld [vmem:[#allocation2 + $0x1c0] sm:$0xff]
    %v88 = vld [vmem:[#allocation2 + $0x1c8] sm:$0xff]
    %v89 = vld [vmem:[#allocation2 + $0x1d0] sm:$0xff]
    %v90 = vld [vmem:[#allocation2 + $0x1d8] sm:$0xff]
    %v91 = vld [vmem:[#allocation2 + $0x1e0] sm:$0xff]
    %v92 = vld [vmem:[#allocation2 + $0x1e8] sm:$0xff]
    %v93 = vld [vmem:[#allocation2 + $0x1f0] sm:$0xff]
    %v94 = vld [vmem:[#allocation2 + $0x1f8] sm:$0xff]
    %v95 = vld [vmem:[#allocation2 + $0x200] sm:$0xff]
    %v96 = vld [vmem:[#allocation2 + $0x208] sm:$0xff]
    %v97 = vld [vmem:[#allocation2 + $0x210] sm:$0xff]
    %v98 = vld [vmem:[#allocation2 + $0x218] sm:$0xff]
    %v99 = vld [vmem:[#allocation2 + $0x220] sm:$0xff]
    %v100 = vld [vmem:[#allocation2 + $0x228] sm:$0xff]
    %v101 = vld [vmem:[#allocation2 + $0x230] sm:$0xff]
    %v102 = vld [vmem:[#allocation2 + $0x238] sm:$0xff]
    %v103 = vld [vmem:[#allocation2 + $0x240] sm:$0xff]
    %v104 = vld [vmem:[#allocation2 + $0x248] sm:$0xff]
    %v105 = vld [vmem:[#allocation2 + $0x250] sm:$0xff]
    %v106 = vld [vmem:[#allocation2 + $0x258] sm:$0xff]
    %v107 = vld [vmem:[#allocation2 + $0x260] sm:$0xff]
    %v108 = vld [vmem:[#allocation2 + $0x268] sm:$0xff]
    %v109 = vld [vmem:[#allocation2 + $0x270] sm:$0xff]
    %v110 = vld [vmem:[#allocation2 + $0x278] sm:$0xff]
    %v111 = vld [vmem:[#allocation2 + $0x280] sm:$0xff]
    %v112 = vld [vmem:[#allocation2 + $0x288] sm:$0xff]
    %v113 = vld [vmem:[#allocation2 + $0x290] sm:$0xff]
    %v114 = vld [vmem:[#allocation2 + $0x298] sm:$0xff]
    %v115 = vld [vmem:[#allocation2 + $0x2a0] sm:$0xff]
    %v116 = vld [vmem:[#allocation2 + $0x2a8] sm:$0xff]
    %v117 = vld [vmem:[#allocation2 + $0x2b0] sm:$0xff]
    %v118 = vld [vmem:[#allocation2 + $0x2b8] sm:$0xff]
    %v119 = vld [vmem:[#allocation2 + $0x2c0] sm:$0xff]
    %v120 = vld [vmem:[#allocation2 + $0x2c8] sm:$0xff]
    %v121 = vld [vmem:[#allocation2 + $0x2d0] sm:$0xff]
    %v122 = vld [vmem:[#allocation2 + $0x2d8] sm:$0xff]
    %v123 = vld [vmem:[#allocation2 + $0x2e0] sm:$0xff]
    %v124 = vld [vmem:[#allocation2 + $0x2e8] sm:$0xff]
    %v125 = vld [vmem:[#allocation2 + $0x2f0] sm:$0xff]
    %v126 = vld [vmem:[#allocation2 + $0x2f8] sm:$0xff]
    %v127 = vld [vmem:[#allocation2 + $0x300] sm:$0xff]
    %v128 = vld [vmem:[#allocation2 + $0x308] sm:$0xff]
    %v129 = vld [vmem:[#allocation2 + $0x310] sm:$0xff]
    %v130 = vld [vmem:[#allocation2 + $0x318] sm:$0xff]
    %v131 = vld [vmem:[#allocation2 + $0x320] sm:$0xff]
    %v132 = vld [vmem:[#allocation2 + $0x328] sm:$0xff]
    %v133 = vld [vmem:[#allocation2 + $0x330] sm:$0xff]
    %v134 = vld [vmem:[#allocation2 + $0x338] sm:$0xff]
    %v135 = vld [vmem:[#allocation2 + $0x340] sm:$0xff]
    %v136 = vld [vmem:[#allocation2 + $0x348] sm:$0xff]
    %v137 = vld [vmem:[#allocation2 + $0x350] sm:$0xff]
    %v138 = vld [vmem:[#allocation2 + $0x358] sm:$0xff]
    %v139 = vld [vmem:[#allocation2 + $0x360] sm:$0xff]
    %v140 = vld [vmem:[#allocation2 + $0x368] sm:$0xff]
    %v141 = vld [vmem:[#allocation2 + $0x370] sm:$0xff]
    %v142 = vld [vmem:[#allocation2 + $0x378] sm:$0xff]
    %v143 = vld [vmem:[#allocation2 + $0x380] sm:$0xff]
    %v144 = vld [vmem:[#allocation2 + $0x388] sm:$0xff]
    %v145 = vld [vmem:[#allocation2 + $0x390] sm:$0xff]
    %v146 = vld [vmem:[#allocation2 + $0x398] sm:$0xff]
    %v147 = vld [vmem:[#allocation2 + $0x3a0] sm:$0xff]
    %v148 = vld [vmem:[#allocation2 + $0x3a8] sm:$0xff]
    %v149 = vld [vmem:[#allocation2 + $0x3b0] sm:$0xff]
    %v150 = vld [vmem:[#allocation2 + $0x3b8] sm:$0xff]
    %v151 = vld [vmem:[#allocation2 + $0x3c0] sm:$0xff]
    %v152 = vld [vmem:[#allocation2 + $0x3c8] sm:$0xff]
    %v153 = vld [vmem:[#allocation2 + $0x3d0] sm:$0xff]
    %v154 = vld [vmem:[#allocation2 + $0x3d8] sm:$0xff]
    %v155 = vld [vmem:[#allocation2 + $0x3e0] sm:$0xff]
    %v156 = vld [vmem:[#allocation2 + $0x3e8] sm:$0xff]
    %v157 = vld [vmem:[#allocation2 + $0x3f0] sm:$0xff]
    %v158 = vld [vmem:[#allocation2 + $0x3f8] sm:$0xff]
    %v159 = vld [vmem:[%s2] sm:$0x1]
    %v161 = vlaneseq
    %v162 = vshrl.u32 %v161, 7
    %v163 = vsub.s32 0, %v162
    %v164 = vrot.slane %v159, %v163
    %v168 = vcombine.high %v29, %v29
    %v170 = vunpack.c.l.s4 1983009808
    %v171 = vunpack.c.0.s8 %v170
    %v172 = vlaneseq
    %v173 = vshrl.u32 %v172, 7
    %v174 = vsub.s32 %v171, %v173
    %v175 = vrot.slane %v29, %v174
    %v177 = vunpack.c.l.s4 1983009808
    %v178 = vunpack.c.0.s8 %v177
    %v179 = vlaneseq
    %v180 = vshrl.u32 %v179, 7
    %v181 = vsub.s32 %v178, %v180
    %v182 = vrot.slane %v168, %v181
    %v183 = vcombine.high %v175, %v175
    %v184 = vcombine.high %v182, %v182
    %v185 = vcombine.high %v30, %v30
    %v187 = vunpack.c.l.s4 1983009808
    %v188 = vunpack.c.0.s8 %v187
    %v189 = vlaneseq
    %v190 = vshrl.u32 %v189, 7
    %v191 = vsub.s32 %v188, %v190
    %v192 = vrot.slane %v30, %v191
    %v194 = vunpack.c.l.s4 1983009808
    %v195 = vunpack.c.0.s8 %v194
    %v196 = vlaneseq
    %v197 = vshrl.u32 %v196, 7
    %v198 = vsub.s32 %v195, %v197
    %v199 = vrot.slane %v185, %v198
    %v200 = vcombine.high %v192, %v192
    %v201 = vcombine.high %v199, %v199
    %210 = vmatprep.subr.mxu0 0.0
    %211 = vmatpush1.msra.mxu0 %v31
    %212 = vmatprep.subr.mxu0 0.0
    %213 = vmatpush1.msra.mxu0 %v32
    %214 = vmatprep.subr.mxu0 0.0
    %215 = vmatpush1.msra.mxu0 %v33
    %216 = vmatprep.subr.mxu0 0.0
    %217 = vmatpush1.msra.mxu0 %v34
    %218 = vmatprep.subr.mxu0 0.0
    %219 = vmatpush1.msra.mxu0 %v35
    %220 = vmatprep.subr.mxu0 0.0
    %221 = vmatpush1.msra.mxu0 %v36
    %222 = vmatprep.subr.mxu0 0.0
    %223 = vmatpush1.msra.mxu0 %v37
    %224 = vmatprep.subr.mxu0 0.0
    %225 = vmatpush1.msra.mxu0 %v38
    %226 = vmatprep.subr.mxu0 0.0
    %227 = vmatpush1.msra.mxu0 %v39
    %228 = vmatprep.subr.mxu0 0.0
    %229 = vmatpush1.msra.mxu0 %v40
    %230 = vmatprep.subr.mxu0 0.0
    %231 = vmatpush1.msra.mxu0 %v41
    %232 = vmatprep.subr.mxu0 0.0
    %233 = vmatpush1.msra.mxu0 %v42
    %234 = vmatprep.subr.mxu0 0.0
    %235 = vmatpush1.msra.mxu0 %v43
    %236 = vmatprep.subr.mxu0 0.0
    %237 = vmatpush1.msra.mxu0 %v44
    %238 = vmatprep.subr.mxu0 0.0
    %239 = vmatpush1.msra.mxu0 %v45
    %240 = vmatprep.subr.mxu0 0.0
    %241 = vmatpush1.msra.mxu0 %v46
    %242 = vmatprep.subr.mxu0 0.0
    %243 = vmatpush1.msra.mxu0 %v47
    %244 = vmatprep.subr.mxu0 0.0
    %245 = vmatpush1.msra.mxu0 %v48
    %246 = vmatprep.subr.mxu0 0.0
    %247 = vmatpush1.msra.mxu0 %v49
    %248 = vmatprep.subr.mxu0 0.0
    %249 = vmatpush1.msra.mxu0 %v50
    %250 = vmatprep.subr.mxu0 0.0
    %251 = vmatpush1.msra.mxu0 %v51
    %252 = vmatprep.subr.mxu0 0.0
    %253 = vmatpush1.msra.mxu0 %v52
    %254 = vmatprep.subr.mxu0 0.0
    %255 = vmatpush1.msra.mxu0 %v53
    %256 = vmatprep.subr.mxu0 0.0
    %257 = vmatpush1.msra.mxu0 %v54
    %258 = vmatprep.subr.mxu0 0.0
    %259 = vmatpush1.msra.mxu0 %v55
    %260 = vmatprep.subr.mxu0 0.0
    %261 = vmatpush1.msra.mxu0 %v56
    %262 = vmatprep.subr.mxu0 0.0
    %263 = vmatpush1.msra.mxu0 %v57
    %264 = vmatprep.subr.mxu0 0.0
    %265 = vmatpush1.msra.mxu0 %v58
    %266 = vmatprep.subr.mxu0 0.0
    %267 = vmatpush1.msra.mxu0 %v59
    %268 = vmatprep.subr.mxu0 0.0
    %269 = vmatpush1.msra.mxu0 %v60
    %270 = vmatprep.subr.mxu0 0.0
    %271 = vmatpush1.msra.mxu0 %v61
    %272 = vmatprep.subr.mxu0 0.0
    %273 = vmatpush1.msra.mxu0 %v62
    %274 = vmatprep.mubr.f32.mxu0 %v183
    %275 = vmatmul.mubr.f32.gmra.mrb[0].mxu0 %v175
    %v276 = vpop.f32.mrb[0].mxu0
    %v277 = vadd.f32 %v164, %v276
    %v278 = vpop.f32.mrb[0].mxu0
    %279 = vdwg.mxu0
    %280 = vmatprep.subr.mxu0 0.0
    %281 = vmatpush1.msra.mxu0 %v63
    %282 = vmatprep.subr.mxu0 0.0
    %283 = vmatpush1.msra.mxu0 %v64
    %284 = vmatprep.subr.mxu0 0.0
    %285 = vmatpush1.msra.mxu0 %v65
    %286 = vmatprep.subr.mxu0 0.0
    %287 = vmatpush1.msra.mxu0 %v66
    %288 = vmatprep.subr.mxu0 0.0
    %289 = vmatpush1.msra.mxu0 %v67
    %290 = vmatprep.subr.mxu0 0.0
    %291 = vmatpush1.msra.mxu0 %v68
    %292 = vmatprep.subr.mxu0 0.0
    %293 = vmatpush1.msra.mxu0 %v69
    %294 = vmatprep.subr.mxu0 0.0
    %295 = vmatpush1.msra.mxu0 %v70
    %296 = vmatprep.subr.mxu0 0.0
    %297 = vmatpush1.msra.mxu0 %v71
    %298 = vmatprep.subr.mxu0 0.0
    %299 = vmatpush1.msra.mxu0 %v72
    %300 = vmatprep.subr.mxu0 0.0
    %301 = vmatpush1.msra.mxu0 %v73
    %302 = vmatprep.subr.mxu0 0.0
    %303 = vmatpush1.msra.mxu0 %v74
    %304 = vmatprep.subr.mxu0 0.0
    %305 = vmatpush1.msra.mxu0 %v75
    %306 = vmatprep.subr.mxu0 0.0
    %307 = vmatpush1.msra.mxu0 %v76
    %308 = vmatprep.subr.mxu0 0.0
    %309 = vmatpush1.msra.mxu0 %v77
    %310 = vmatprep.subr.mxu0 0.0
    %311 = vmatpush1.msra.mxu0 %v78
    %312 = vmatprep.subr.mxu0 0.0
    %313 = vmatpush1.msra.mxu0 %v79
    %314 = vmatprep.subr.mxu0 0.0
    %315 = vmatpush1.msra.mxu0 %v80
    %316 = vmatprep.subr.mxu0 0.0
    %317 = vmatpush1.msra.mxu0 %v81
    %318 = vmatprep.subr.mxu0 0.0
    %319 = vmatpush1.msra.mxu0 %v82
    %320 = vmatprep.subr.mxu0 0.0
    %321 = vmatpush1.msra.mxu0 %v83
    %322 = vmatprep.subr.mxu0 0.0
    %323 = vmatpush1.msra.mxu0 %v84
    %324 = vmatprep.subr.mxu0 0.0
    %325 = vmatpush1.msra.mxu0 %v85
    %326 = vmatprep.subr.mxu0 0.0
    %327 = vmatpush1.msra.mxu0 %v86
    %328 = vmatprep.subr.mxu0 0.0
    %329 = vmatpush1.msra.mxu0 %v87
    %330 = vmatprep.subr.mxu0 0.0
    %331 = vmatpush1.msra.mxu0 %v88
    %332 = vmatprep.subr.mxu0 0.0
    %333 = vmatpush1.msra.mxu0 %v89
    %334 = vmatprep.subr.mxu0 0.0
    %335 = vmatpush1.msra.mxu0 %v90
    %336 = vmatprep.subr.mxu0 0.0
    %337 = vmatpush1.msra.mxu0 %v91
    %338 = vmatprep.subr.mxu0 0.0
    %339 = vmatpush1.msra.mxu0 %v92
    %340 = vmatprep.subr.mxu0 0.0
    %341 = vmatpush1.msra.mxu0 %v93
    %342 = vmatprep.subr.mxu0 0.0
    %343 = vmatpush1.msra.mxu0 %v94
    %344 = vmatprep.mubr.f32.mxu0 %v184
    %345 = vmatmul.mubr.f32.gmra.mrb[0].mxu0 %v182
    %v346 = vpop.f32.mrb[0].mxu0
    %v347 = vadd.f32 %v277, %v346
    %v348 = vpop.f32.mrb[0].mxu0
    %349 = vdwg.mxu0
    %350 = vmatprep.subr.mxu0 0.0
    %351 = vmatpush1.msra.mxu0 %v95
    %352 = vmatprep.subr.mxu0 0.0
    %353 = vmatpush1.msra.mxu0 %v96
    %354 = vmatprep.subr.mxu0 0.0
    %355 = vmatpush1.msra.mxu0 %v97
    %356 = vmatprep.subr.mxu0 0.0
    %357 = vmatpush1.msra.mxu0 %v98
    %358 = vmatprep.subr.mxu0 0.0
    %359 = vmatpush1.msra.mxu0 %v99
    %360 = vmatprep.subr.mxu0 0.0
    %361 = vmatpush1.msra.mxu0 %v100
    %362 = vmatprep.subr.mxu0 0.0
    %363 = vmatpush1.msra.mxu0 %v101
    %364 = vmatprep.subr.mxu0 0.0
    %365 = vmatpush1.msra.mxu0 %v102
    %366 = vmatprep.subr.mxu0 0.0
    %367 = vmatpush1.msra.mxu0 %v103
    %368 = vmatprep.subr.mxu0 0.0
    %369 = vmatpush1.msra.mxu0 %v104
    %370 = vmatprep.subr.mxu0 0.0
    %371 = vmatpush1.msra.mxu0 %v105
    %372 = vmatprep.subr.mxu0 0.0
    %373 = vmatpush1.msra.mxu0 %v106
    %374 = vmatprep.subr.mxu0 0.0
    %375 = vmatpush1.msra.mxu0 %v107
    %376 = vmatprep.subr.mxu0 0.0
    %377 = vmatpush1.msra.mxu0 %v108
    %378 = vmatprep.subr.mxu0 0.0
    %379 = vmatpush1.msra.mxu0 %v109
    %380 = vmatprep.subr.mxu0 0.0
    %381 = vmatpush1.msra.mxu0 %v110
    %382 = vmatprep.subr.mxu0 0.0
    %383 = vmatpush1.msra.mxu0 %v111
    %384 = vmatprep.subr.mxu0 0.0
    %385 = vmatpush1.msra.mxu0 %v112
    %386 = vmatprep.subr.mxu0 0.0
    %387 = vmatpush1.msra.mxu0 %v113
    %388 = vmatprep.subr.mxu0 0.0
    %389 = vmatpush1.msra.mxu0 %v114
    %390 = vmatprep.subr.mxu0 0.0
    %391 = vmatpush1.msra.mxu0 %v115
    %392 = vmatprep.subr.mxu0 0.0
    %393 = vmatpush1.msra.mxu0 %v116
    %394 = vmatprep.subr.mxu0 0.0
    %395 = vmatpush1.msra.mxu0 %v117
    %396 = vmatprep.subr.mxu0 0.0
    %397 = vmatpush1.msra.mxu0 %v118
    %398 = vmatprep.subr.mxu0 0.0
    %399 = vmatpush1.msra.mxu0 %v119
    %400 = vmatprep.subr.mxu0 0.0
    %401 = vmatpush1.msra.mxu0 %v120
    %402 = vmatprep.subr.mxu0 0.0
    %403 = vmatpush1.msra.mxu0 %v121
    %404 = vmatprep.subr.mxu0 0.0
    %405 = vmatpush1.msra.mxu0 %v122
    %406 = vmatprep.subr.mxu0 0.0
    %407 = vmatpush1.msra.mxu0 %v123
    %408 = vmatprep.subr.mxu0 0.0
    %409 = vmatpush1.msra.mxu0 %v124
    %410 = vmatprep.subr.mxu0 0.0
    %411 = vmatpush1.msra.mxu0 %v125
    %412 = vmatprep.subr.mxu0 0.0
    %413 = vmatpush1.msra.mxu0 %v126
    %414 = vmatprep.mubr.f32.mxu0 %v200
    %415 = vmatmul.mubr.f32.gmra.mrb[0].mxu0 %v192
    %v416 = vpop.f32.mrb[0].mxu0
    %v417 = vadd.f32 %v347, %v416
    %v418 = vpop.f32.mrb[0].mxu0
    %419 = vdwg.mxu0
    %420 = vmatprep.subr.mxu0 0.0
    %421 = vmatpush1.msra.mxu0 %v127
    %422 = vmatprep.subr.mxu0 0.0
    %423 = vmatpush1.msra.mxu0 %v128
    %424 = vmatprep.subr.mxu0 0.0
    %425 = vmatpush1.msra.mxu0 %v129
    %426 = vmatprep.subr.mxu0 0.0
    %427 = vmatpush1.msra.mxu0 %v130
    %428 = vmatprep.subr.mxu0 0.0
    %429 = vmatpush1.msra.mxu0 %v131
    %430 = vmatprep.subr.mxu0 0.0
    %431 = vmatpush1.msra.mxu0 %v132
    %432 = vmatprep.subr.mxu0 0.0
    %433 = vmatpush1.msra.mxu0 %v133
    %434 = vmatprep.subr.mxu0 0.0
    %435 = vmatpush1.msra.mxu0 %v134
    %436 = vmatprep.subr.mxu0 0.0
    %437 = vmatpush1.msra.mxu0 %v135
    %438 = vmatprep.subr.mxu0 0.0
    %439 = vmatpush1.msra.mxu0 %v136
    %440 = vmatprep.subr.mxu0 0.0
    %441 = vmatpush1.msra.mxu0 %v137
    %442 = vmatprep.subr.mxu0 0.0
    %443 = vmatpush1.msra.mxu0 %v138
    %444 = vmatprep.subr.mxu0 0.0
    %445 = vmatpush1.msra.mxu0 %v139
    %446 = vmatprep.subr.mxu0 0.0
    %447 = vmatpush1.msra.mxu0 %v140
    %448 = vmatprep.subr.mxu0 0.0
    %449 = vmatpush1.msra.mxu0 %v141
    %450 = vmatprep.subr.mxu0 0.0
    %451 = vmatpush1.msra.mxu0 %v142
    %452 = vmatprep.subr.mxu0 0.0
    %453 = vmatpush1.msra.mxu0 %v143
    %454 = vmatprep.subr.mxu0 0.0
    %455 = vmatpush1.msra.mxu0 %v144
    %456 = vmatprep.subr.mxu0 0.0
    %457 = vmatpush1.msra.mxu0 %v145
    %458 = vmatprep.subr.mxu0 0.0
    %459 = vmatpush1.msra.mxu0 %v146
    %460 = vmatprep.subr.mxu0 0.0
    %461 = vmatpush1.msra.mxu0 %v147
    %462 = vmatprep.subr.mxu0 0.0
    %463 = vmatpush1.msra.mxu0 %v148
    %464 = vmatprep.subr.mxu0 0.0
    %465 = vmatpush1.msra.mxu0 %v149
    %466 = vmatprep.subr.mxu0 0.0
    %467 = vmatpush1.msra.mxu0 %v150
    %468 = vmatprep.subr.mxu0 0.0
    %469 = vmatpush1.msra.mxu0 %v151
    %470 = vmatprep.subr.mxu0 0.0
    %471 = vmatpush1.msra.mxu0 %v152
    %472 = vmatprep.subr.mxu0 0.0
    %473 = vmatpush1.msra.mxu0 %v153
    %474 = vmatprep.subr.mxu0 0.0
    %475 = vmatpush1.msra.mxu0 %v154
    %476 = vmatprep.subr.mxu0 0.0
    %477 = vmatpush1.msra.mxu0 %v155
    %478 = vmatprep.subr.mxu0 0.0
    %479 = vmatpush1.msra.mxu0 %v156
    %480 = vmatprep.subr.mxu0 0.0
    %481 = vmatpush1.msra.mxu0 %v157
    %482 = vmatprep.subr.mxu0 0.0
    %483 = vmatpush1.msra.mxu0 %v158
    %484 = vmatprep.mubr.f32.mxu0 %v201
    %485 = vmatmul.mubr.f32.gmra.mrb[0].mxu0 %v199
    %v486 = vpop.f32.mrb[0].mxu0
    %v487 = vadd.f32 %v417, %v486
    %v488 = vpop.f32.mrb[0].mxu0
    %489 = vdwg.mxu0
    %vm490 = vcmp.ge.f32.partialorder %v487, 0.0
    %v491 = vmul.f32 %v487, 0.01
    %v492 = vsel %vm490, %v487, %v491
    %493 = vst [vmem:[#allocation5] sm:$0x3] %v492
    // Predicated region
    $region18: #{mlp_base_forward.1} parent=1 // pred_check
      _
    $region19: #{mlp_base_forward.1} parent=1 // pred_check_branch
      %495 = sbr.rel (0) target = $region21
    $region20: #{mlp_base_forward.1} parent=1 // pred_region
      %s497 = ssub.s32 32, 32
      %498 = vsyncadd [#allocation4], %s497
      %s500 = sshll.u32 [#allocation5], 4
      %s501 = int_to_ptr.vmem [resolvable:$true] %s500
      %503 = dma.vmem_to_hbm [thread:$0]  %s501, 32, %s3, [#allocation4]
    $region21: #{mlp_base_forward.1} parent=1 // pred_fallthru
      _
    // Predicated region
    $region22: #{mlp_base_forward.1} parent=1 // pred_check
      _
    $region23: #{mlp_base_forward.1} parent=1 // pred_check_branch
      %505 = sbr.rel (0) target = $region25
    $region24: #{mlp_base_forward.1} parent=1 // pred_region
      %506 = dma.done [#allocation4], 32
    $region25: #{mlp_base_forward.1} parent=1 // pred_fallthru
      _
    %507 = vsyncpa [#allocation3], 1
    %508 = vsyncpa [#allocation4], 1

</llo_original>
